<compile_context>
chip_gen: v7x
topology: tpu7x:2x2x1
jax: 0.10.0
libtpu: 0.0.40
codegen_flags: <defaults>
</compile_context>

<pallas_src>
from functools import partial

import jax
import jax.numpy as jnp
from jax.experimental import pallas as pl
from jax.experimental.pallas import tpu as pltpu

ETA = 1e-6                         # Constants.eta in the reference repo
HIDDEN_DIM = 128
TK_MAX = 2048                      # feature (K) tile
VMEM_TARGET = 32 * 1024 * 1024     # pipelined-VMEM budget, safe on v5e/v6e/v7x
NEG_INF = -1e30                    # masks padded softmax logit columns


def _round_up(n, m):
    return ((n + m - 1) // m) * m


def _enc_fnn_kernel(x_ref, w1_ref, b1_ref, wh_ref, bh_ref, mu_ref, lv_ref,
                    acc_ref, *, o_pad, d_total, tk, mask_tail_k):
    k = pl.program_id(1)
    nk = pl.num_programs(1)

    @pl.when(k == 0)
    def _init():
        acc_ref[...] = jnp.zeros_like(acc_ref)

    # Cast the native-dtype x tile in-kernel (reference does x.float(); bf16 MXU
    # inputs + f32 accumulation is the TPU-native equivalent).
    x = x_ref[...].astype(jnp.bfloat16)
    w1 = w1_ref[...]
    if mask_tail_k:
        # Ragged trailing K block: zero out-of-bounds x columns and W1 rows so
        # undefined VMEM contents (possibly NaN/inf bit patterns) never reach
        # the accumulator. Identity on non-final K blocks; cheap VPU work.
        col = k * tk + jax.lax.broadcasted_iota(jnp.int32, x.shape, 1)
        x = jnp.where(col < d_total, x, jnp.zeros_like(x))
        row = k * tk + jax.lax.broadcasted_iota(jnp.int32, w1.shape, 0)
        w1 = jnp.where(row < d_total, w1, jnp.zeros_like(w1))

    acc_ref[...] += jnp.dot(x, w1, preferred_element_type=jnp.float32)

    @pl.when(k == nk - 1)
    def _finish():
        # Hidden activation: bias + ReLU on the f32 accumulator.
        e = jnp.maximum(acc_ref[...] + b1_ref[...], 0.0)
        # Fused head: [mu | logits] = e @ [W21 | W22] + [b21 | b22] (one MXU pass).
        h = jnp.dot(e.astype(jnp.bfloat16), wh_ref[...],
                    preferred_element_type=jnp.float32) + bh_ref[...]
        mu = h[:, :o_pad]            # split at lane-128 boundary: no lane shuffle
        s = h[:, o_pad:]
        # softmax along last axis + eta (padded logit columns carry bias -1e30,
        # so they contribute ~0 to the denominator).
        s = s - jnp.max(s, axis=-1, keepdims=True)
        p = jnp.exp(s)
        denom = jnp.sum(p, axis=-1, keepdims=True)
        lv = p * pl.reciprocal(denom, approx=True) + ETA
        mu_ref[...] = mu.astype(mu_ref.dtype)
        lv_ref[...] = lv.astype(lv_ref.dtype)


def pack_params(params):
    """One-time packing of f32 Linear params into the kernel layout:
    bf16 weights / f32 biases, fc21+fc22 fused into one head, each head padded to
    a lane-dense multiple of 128 output columns. Padded mu columns use zero
    weight+bias; padded softmax (logvar) columns use bias -1e30 so the softmax
    over the real columns is unchanged."""
    O = params["w21"].shape[1]
    o_pad = _round_up(O, 128)
    pad = o_pad - O
    w21 = jnp.pad(params["w21"], ((0, 0), (0, pad)))
    b21 = jnp.pad(params["b21"], ((0, 0), (0, pad)))
    w22 = jnp.pad(params["w22"], ((0, 0), (0, pad)))
    b22 = jnp.pad(params["b22"], ((0, 0), (0, pad)), constant_values=NEG_INF)
    return {
        "w1": params["w1"].astype(jnp.bfloat16),
        "b1": params["b1"].astype(jnp.float32),
        "w_head": jnp.concatenate([w21, w22], axis=1).astype(jnp.bfloat16),
        "b_head": jnp.concatenate([b21, b22], axis=1).astype(jnp.float32),
    }


def enc_fnn_forward(x_nchw, kparams, out_dim):
    """Run Enc_FNN forward. x_nchw: (B, C, H, W), any float dtype (streamed
    as-is, cast in-kernel). Returns (mu, lv), each (B, out_dim) f32."""
    B = x_nchw.shape[0]
    x_flat = x_nchw.reshape(B, -1)       # row-major flatten == torch x.view(B, -1)
    D = x_flat.shape[1]
    H = kparams["w1"].shape[1]
    O2 = kparams["w_head"].shape[1]      # 2 * padded out_dim
    o_pad = O2 // 2
    x_bytes = jnp.dtype(x_flat.dtype).itemsize

    # ---- K (feature) tiling: bound VMEM regardless of D ---------------------
    if D <= TK_MAX:
        TK, mask_tail_k = D, False       # single K block, full-dim (no masking)
    else:
        TK = TK_MAX                      # multiple of 128
        mask_tail_k = (D % TK != 0)
    nk = pl.cdiv(D, TK)

    # ---- batch tile derived from the VMEM budget ----------------------------
    # per-batch-row pipelined bytes: x (double-buffered) + f32 acc + 2 outputs
    per_row = 2 * TK * x_bytes + H * 4 + 2 * 2 * o_pad * 4
    # grid-varying W1 K-tile (double-buffered, bf16) + small invariant operands
    fixed = 2 * TK * H * 2 + 2 * (H * 4 + H * O2 * 2 + O2 * 4)
    tb = max(8, min(1024, ((VMEM_TARGET - fixed) // per_row) // 8 * 8))
    TB = B if B <= 8 else min(tb, _round_up(B, 8))
    # No jnp.pad of x: Pallas handles ragged trailing batch blocks; garbage rows
    # only produce garbage output rows that are sliced off below.

    vmem_limit = int(min(
        64 * 1024 * 1024,
        2 * TB * TK * x_bytes + TB * H * 4 + 2 * 2 * TB * o_pad * 4 + fixed
        + 2 * 1024 * 1024))              # headroom

    kernel = partial(_enc_fnn_kernel, o_pad=o_pad, d_total=D, tk=TK,
                     mask_tail_k=mask_tail_k)

    cost = pl.CostEstimate(
        flops=2 * B * D * H + 2 * B * H * O2,
        transcendentals=B * o_pad,
        bytes_accessed=B * D * x_bytes + D * H * 2 + H * O2 * 2
                       + 2 * B * o_pad * 4,
    )

    mu_full, lv_full = pl.pallas_call(
        kernel,
        out_shape=(jax.ShapeDtypeStruct((B, o_pad), jnp.float32),   # mu (padded)
                   jax.ShapeDtypeStruct((B, o_pad), jnp.float32)),  # lv (padded)
        grid=(pl.cdiv(B, TB), nk),
        in_specs=[
            pl.BlockSpec((TB, TK), lambda i, k: (i, k)),     # x: streamed (batch, K)
            pl.BlockSpec((TK, H), lambda i, k: (k, 0)),      # W1: streamed over K
            pl.BlockSpec((1, H), lambda i, k: (0, 0)),       # b1 (grid-invariant)
            pl.BlockSpec((H, O2), lambda i, k: (0, 0)),      # fused head weight
            pl.BlockSpec((1, O2), lambda i, k: (0, 0)),      # fused head bias
        ],
        out_specs=(
            pl.BlockSpec((TB, o_pad), lambda i, k: (i, 0)),  # lane-dense (128-wide)
            pl.BlockSpec((TB, o_pad), lambda i, k: (i, 0)),
        ),
        scratch_shapes=[pltpu.VMEM((TB, H), jnp.float32)],   # f32 hidden accumulator
        compiler_params=pltpu.CompilerParams(
            dimension_semantics=("parallel", "arbitrary"),   # batch ∥, K reduction
            vmem_limit_bytes=vmem_limit,
        ),
        cost_estimate=cost,
    )(x_flat, kparams["w1"], kparams["b1"], kparams["w_head"], kparams["b_head"])

    return mu_full[:, :out_dim], lv_full[:, :out_dim]


def init_params(key, data_dim, latent_dim, latent_private=None):
    """Deterministic f32 init mimicking PyTorch Linear default U(-1/sqrt(fan_in), +)."""
    D = 1
    for d in data_dim:
        D *= int(d)
    out_dim = latent_dim + (latent_private if latent_private is not None else 0)
    ks = jax.random.split(key, 6)

    def lin(kw, kb, fan_in, fan_out):
        bound = 1.0 / float(fan_in) ** 0.5
        w = jax.random.uniform(kw, (fan_in, fan_out), jnp.float32, -bound, bound)
        b = jax.random.uniform(kb, (1, fan_out), jnp.float32, -bound, bound)
        return w, b

    w1, b1 = lin(ks[0], ks[1], D, HIDDEN_DIM)
    w21, b21 = lin(ks[2], ks[3], HIDDEN_DIM, out_dim)
    w22, b22 = lin(ks[4], ks[5], HIDDEN_DIM, out_dim)
    return {"w1": w1, "b1": b1, "w21": w21, "b21": b21, "w22": w22, "b22": b22}


def _check_case(key, B, data_dim, latent_dim, latent_private=None):
    kx, kp = jax.random.split(key)
    x = jax.random.normal(kx, (B,) + tuple(data_dim), jnp.float32)
    params = init_params(kp, data_dim, latent_dim, latent_private)
    kparams = pack_params(params)
    out_dim = latent_dim + (latent_private if latent_private is not None else 0)

    mu, lv = enc_fnn_forward(x, kparams, out_dim)
    jax.block_until_ready((mu, lv))

    # Pure-JAX f32 reference (tolerances loosened for bf16 MXU inputs + approx
    # reciprocal; structure/weights/flatten must still match exactly).
    xf = x.reshape(B, -1)
    e_ref = jnp.maximum(xf @ params["w1"] + params["b1"], 0.0)
    mu_ref = e_ref @ params["w21"] + params["b21"]
    lv_ref = jax.nn.softmax(e_ref @ params["w22"] + params["b22"], axis=-1) + ETA

    assert mu.shape == (B, out_dim) and lv.shape == (B, out_dim)
    assert jnp.allclose(mu, mu_ref, atol=5e-2, rtol=5e-2), "mu mismatch"
    assert jnp.allclose(lv, lv_ref, atol=5e-2, rtol=5e-2), "lv mismatch"
    assert bool(jnp.all(lv > 0.0)), "lv must be positive (softmax + eta)"


if __name__ == "__main__":
    key = jax.random.PRNGKey(0)
    k1, k2 = jax.random.split(key)

    # Primary small case from the module spec: B=2, data_dim=(4,16,16) -> D=1024.
    _check_case(k1, B=2, data_dim=(4, 16, 16), latent_dim=16)

    # Exercises the K-tiled reduction with a ragged K tail (D=7500 > TK_MAX,
    # D % TK != 0) and a ragged trailing batch block (B=10).
    _check_case(k2, B=10, data_dim=(3, 50, 50), latent_dim=16)

    print("KERNEL_OK")
</pallas_src>

<mosaic_0001>
module attributes {stable_mosaic.version = 11 : i64} {
  func.func @_enc_fnn_kernel(%arg0: i32, %arg1: i32, %arg2: memref<2x1024xf32, #tpu.memory_space<vmem>>, %arg3: memref<1024x128xbf16, #tpu.memory_space<vmem>>, %arg4: memref<1x128xf32, #tpu.memory_space<vmem>>, %arg5: memref<128x256xbf16, #tpu.memory_space<vmem>>, %arg6: memref<1x256xf32, #tpu.memory_space<vmem>>, %arg7: memref<2x128xf32, #tpu.memory_space<vmem>>, %arg8: memref<2x128xf32, #tpu.memory_space<vmem>>, %arg9: memref<2x128xf32, #tpu.memory_space<vmem>>) attributes {dimension_semantics = [#tpu.dimension_semantics<parallel>, #tpu.dimension_semantics<arbitrary>], iteration_bounds = array<i64: 1, 1>, scalar_prefetch = 0 : i64, scratch_operands = 1 : i64, tpu.core_type = #tpu.core_type<tc>, window_params = [{transform_indices = @transform_0, window_bounds = array<i64: 2, 1024>}, {transform_indices = @transform_1, window_bounds = array<i64: 1024, 128>}, {pipeline_mode = #tpu.pipeline_mode<synchronous>, transform_indices = @transform_2, window_bounds = array<i64: 1, 128>}, {pipeline_mode = #tpu.pipeline_mode<synchronous>, transform_indices = @transform_3, window_bounds = array<i64: 128, 256>}, {pipeline_mode = #tpu.pipeline_mode<synchronous>, transform_indices = @transform_4, window_bounds = array<i64: 1, 256>}, {transform_indices = @transform_5, window_bounds = array<i64: 2, 128>}, {transform_indices = @transform_6, window_bounds = array<i64: 2, 128>}]} {
    %c0_i32 = arith.constant 0 : i32
    %0 = arith.cmpi eq, %arg1, %c0_i32 : i32
    %1 = arith.extui %0 : i1 to i32
    %c0_i32_0 = arith.constant 0 : i32
    %2 = arith.cmpi ne, %1, %c0_i32_0 : i32
    scf.if %2 {
      %cst_10 = arith.constant 0.000000e+00 : f32
      %13 = vector.broadcast %cst_10 : f32 to vector<2x128xf32>
      %c0_11 = arith.constant 0 : index
      %c0_12 = arith.constant 0 : index
      %14 = vector.load %arg9[%c0_11, %c0_12] : memref<2x128xf32, #tpu.memory_space<vmem>>, vector<2x128xf32>
      tpu.vector_store %arg9[%c0_11, %c0_12], %13 {strides = array<i32>} : memref<2x128xf32, #tpu.memory_space<vmem>>, vector<2x128xf32>,
    } else {
    }
    %c0 = arith.constant 0 : index
    %c0_1 = arith.constant 0 : index
    %3 = vector.load %arg2[%c0, %c0_1] : memref<2x1024xf32, #tpu.memory_space<vmem>>, vector<2x1024xf32>
    %4 = arith.truncf %3 : vector<2x1024xf32> to vector<2x1024xbf16>
    %c0_2 = arith.constant 0 : index
    %c0_3 = arith.constant 0 : index
    %5 = vector.load %arg3[%c0_2, %c0_3] : memref<1024x128xbf16, #tpu.memory_space<vmem>>, vector<1024x128xbf16>
    %c0_4 = arith.constant 0 : index
    %c0_5 = arith.constant 0 : index
    %6 = vector.load %arg9[%c0_4, %c0_5] : memref<2x128xf32, #tpu.memory_space<vmem>>, vector<2x128xf32>
    %cst = arith.constant dense<0.000000e+00> : vector<2x128xf32>
    %7 = tpu.matmul %4, %5, %cst {dimension_numbers = #tpu.dot_dimension_numbers<[1], [0], [0], [1], [0, 0, 1, 1], [], []>} : vector<2x1024xbf16>, vector<1024x128xbf16>, vector<2x128xf32> -> vector<2x128xf32>
    %8 = arith.addf %6, %7 : vector<2x128xf32>
    %c0_6 = arith.constant 0 : index
    %c0_7 = arith.constant 0 : index
    %9 = vector.load %arg9[%c0_6, %c0_7] : memref<2x128xf32, #tpu.memory_space<vmem>>, vector<2x128xf32>
    tpu.vector_store %arg9[%c0_6, %c0_7], %8 {strides = array<i32>} : memref<2x128xf32, #tpu.memory_space<vmem>>, vector<2x128xf32>,
    %c0_i32_8 = arith.constant 0 : i32
    %10 = arith.cmpi eq, %arg1, %c0_i32_8 : i32
    %11 = arith.extui %10 : i1 to i32
    %c0_i32_9 = arith.constant 0 : i32
    %12 = arith.cmpi ne, %11, %c0_i32_9 : i32
    scf.if %12 {
      %c0_10 = arith.constant 0 : index
      %c0_11 = arith.constant 0 : index
      %13 = vector.load %arg9[%c0_10, %c0_11] : memref<2x128xf32, #tpu.memory_space<vmem>>, vector<2x128xf32>
      %c0_12 = arith.constant 0 : index
      %c0_13 = arith.constant 0 : index
      %14 = vector.load %arg4[%c0_12, %c0_13] : memref<1x128xf32, #tpu.memory_space<vmem>>, vector<1x128xf32>
      %15 = vector.broadcast %14 : vector<1x128xf32> to vector<2x128xf32>
      %16 = arith.addf %13, %15 : vector<2x128xf32>
      %cst_14 = arith.constant 0.000000e+00 : f32
      %17 = vector.broadcast %cst_14 : f32 to vector<2x128xf32>
      %18 = arith.maximumf %16, %17 : vector<2x128xf32>
      %19 = arith.truncf %18 : vector<2x128xf32> to vector<2x128xbf16>
      %c0_15 = arith.constant 0 : index
      %c0_16 = arith.constant 0 : index
      %20 = vector.load %arg5[%c0_15, %c0_16] : memref<128x256xbf16, #tpu.memory_space<vmem>>, vector<128x256xbf16>
      %cst_17 = arith.constant dense<0.000000e+00> : vector<2x256xf32>
      %21 = tpu.matmul %19, %20, %cst_17 {dimension_numbers = #tpu.dot_dimension_numbers<[1], [0], [0], [1], [0, 0, 1, 1], [], []>} : vector<2x128xbf16>, vector<128x256xbf16>, vector<2x256xf32> -> vector<2x256xf32>
      %c0_18 = arith.constant 0 : index
      %c0_19 = arith.constant 0 : index
      %22 = vector.load %arg6[%c0_18, %c0_19] : memref<1x256xf32, #tpu.memory_space<vmem>>, vector<1x256xf32>
      %23 = vector.broadcast %22 : vector<1x256xf32> to vector<2x256xf32>
      %24 = arith.addf %21, %23 : vector<2x256xf32>
      %25 = vector.extract_strided_slice %24 {offsets = [0, 0], sizes = [2, 128], strides = [1, 1]} : vector<2x256xf32> to vector<2x128xf32>
      %26 = vector.extract_strided_slice %24 {offsets = [0, 128], sizes = [2, 128], strides = [1, 1]} : vector<2x256xf32> to vector<2x128xf32>
      %cst_20 = arith.constant dense<0xFF800000> : vector<2xf32>
      %27 = vector.multi_reduction <maximumf>, %26, %cst_20 [1] : vector<2x128xf32> to vector<2xf32>
      %28 = vector.shape_cast %27 : vector<2xf32> to vector<2x1xf32>
      %29 = vector.broadcast %28 : vector<2x1xf32> to vector<2x128xf32>
      %30 = arith.subf %26, %29 : vector<2x128xf32>
      %31 = math.exp %30 : vector<2x128xf32>
      %cst_21 = arith.constant dense<0.000000e+00> : vector<2xf32>
      %32 = vector.multi_reduction <add>, %31, %cst_21 [1] : vector<2x128xf32> to vector<2xf32>
      %33 = vector.shape_cast %32 : vector<2xf32> to vector<2x1xf32>
      %34 = tpu.reciprocal %33 {approx = true} : vector<2x1xf32> -> vector<2x1xf32>
      %35 = vector.broadcast %34 : vector<2x1xf32> to vector<2x128xf32>
      %36 = arith.mulf %31, %35 : vector<2x128xf32>
      %cst_22 = arith.constant 9.99999997E-7 : f32
      %37 = vector.broadcast %cst_22 : f32 to vector<2x128xf32>
      %38 = arith.addf %36, %37 : vector<2x128xf32>
      %c0_23 = arith.constant 0 : index
      %c0_24 = arith.constant 0 : index
      %39 = vector.load %arg7[%c0_23, %c0_24] : memref<2x128xf32, #tpu.memory_space<vmem>>, vector<2x128xf32>
      tpu.vector_store %arg7[%c0_23, %c0_24], %25 {strides = array<i32>} : memref<2x128xf32, #tpu.memory_space<vmem>>, vector<2x128xf32>,
      %c0_25 = arith.constant 0 : index
      %c0_26 = arith.constant 0 : index
      %40 = vector.load %arg8[%c0_25, %c0_26] : memref<2x128xf32, #tpu.memory_space<vmem>>, vector<2x128xf32>
      tpu.vector_store %arg8[%c0_25, %c0_26], %38 {strides = array<i32>} : memref<2x128xf32, #tpu.memory_space<vmem>>, vector<2x128xf32>,
    } else {
    }
    return
  }
  func.func @transform_0(%arg0: i32, %arg1: i32) -> (i32, i32) {
    %c0_i32 = arith.constant 0 : i32
    return %arg0, %arg1 : i32, i32
  }
  func.func @transform_1(%arg0: i32, %arg1: i32) -> (i32, i32) {
    %c0_i32 = arith.constant 0 : i32
    %c0_i32_0 = arith.constant 0 : i32
    return %arg1, %c0_i32 : i32, i32
  }
  func.func @transform_2(%arg0: i32, %arg1: i32) -> (i32, i32) {
    %c0_i32 = arith.constant 0 : i32
    %c0_i32_0 = arith.constant 0 : i32
    %c0_i32_1 = arith.constant 0 : i32
    return %c0_i32, %c0_i32_0 : i32, i32
  }
  func.func @transform_3(%arg0: i32, %arg1: i32) -> (i32, i32) {
    %c0_i32 = arith.constant 0 : i32
    %c0_i32_0 = arith.constant 0 : i32
    %c0_i32_1 = arith.constant 0 : i32
    return %c0_i32, %c0_i32_0 : i32, i32
  }
  func.func @transform_4(%arg0: i32, %arg1: i32) -> (i32, i32) {
    %c0_i32 = arith.constant 0 : i32
    %c0_i32_0 = arith.constant 0 : i32
    %c0_i32_1 = arith.constant 0 : i32
    return %c0_i32, %c0_i32_0 : i32, i32
  }
  func.func @transform_5(%arg0: i32, %arg1: i32) -> (i32, i32) {
    %c0_i32 = arith.constant 0 : i32
    %c0_i32_0 = arith.constant 0 : i32
    return %arg0, %c0_i32 : i32, i32
  }
  func.func @transform_6(%arg0: i32, %arg1: i32) -> (i32, i32) {
    %c0_i32 = arith.constant 0 : i32
    %c0_i32_0 = arith.constant 0 : i32
    return %arg0, %c0_i32 : i32, i32
  }
}

</mosaic_0001>

<llo_original>
// kernel: tpu_custom_call.1
$region0: #{tpu_custom_call.1}
  #allocation0 [shape = 'u32[]', space=smem, size = 0x4, offset = 0x4, fixed_abs, tag = 'smem constant byte address 0x4 - core index']
  #allocation1 [shape = 'u32[144,128]{1,0:T(1,128)}', space=vmem, size = 0x12000, scoped, tag = 'internal scratch']
  #allocation2 [shape = 'f32[2,128]{1,0:T(2,128)}', space=vmem, size = 0x400, scoped, tag = 'scratch operand']
  %s0 = inlined_call_operand.hbm [shape: f32[2,1024], index: 0, kind: input, shape index: {}]
  %s1 = inlined_call_operand.hbm [shape: bf16[1024,128], index: 1, kind: input, shape index: {}]
  %s2 = inlined_call_operand.vmem [shape: f32[1,128], index: 2, kind: input, shape index: {}]
  %s3 = inlined_call_operand.hbm [shape: bf16[128,256], index: 3, kind: input, shape index: {}]
  %s4 = inlined_call_operand.vmem [shape: f32[1,256], index: 4, kind: input, shape index: {}]
  %s5 = inlined_call_operand.hbm [shape: f32[2,128], index: 5, kind: output, shape index: {0}]
  %s6 = inlined_call_operand.hbm [shape: f32[2,128], index: 6, kind: output, shape index: {1}]
  %7 = xla_tuple %s5, %s6
  %s8 = sld [smem:[#allocation0]]
  $region58: #{tpu_custom_call.1} parent=0
    _
  %s10 = ssub.s32 1, %s8
  %s11 = scalar_select 0, %s10, %s8
  $region1: #{tpu_custom_call.1} parent=0
    #allocation3 [shape = 'u8[8192]{0}', space=vmem, size = 0x2000, scoped, tag = 'input window, operand 0, single buffered']
    #allocation4 [shape = 's32[1]{0}', space=sflag, size = 0x4, scoped, tag = 'scoped memory for tpu_custom_call.1']
    #allocation5 [shape = 's32[1]{0}', space=sflag, size = 0x4, scoped, tag = 'scoped memory for tpu_custom_call.1']
    #allocation6 [shape = 'u8[262144]{0}', space=vmem, size = 0x40000, scoped, tag = 'input window, operand 1, single buffered']
    #allocation7 [shape = 's32[1]{0}', space=sflag, size = 0x4, scoped, tag = 'scoped memory for tpu_custom_call.1']
    #allocation8 [shape = 'u8[65536]{0}', space=vmem, size = 0x10000, scoped, tag = 'input window, operand 3, single buffered']
    #allocation9 [shape = 'u8[1024]{0}', space=vmem, size = 0x400, scoped, tag = 'output window, operand 0, single buffered']
    #allocation10 [shape = 'u8[1024]{0}', space=vmem, size = 0x400, scoped, tag = 'output window, operand 1, single buffered']
    #allocation11 [shape = 's32[1]{0}', space=sflag, size = 0x4, scoped, tag = 'scoped memory for tpu_custom_call.1']
    %12 = vsyncpa [#allocation4], 0
    %13 = vsyncpa [#allocation7], 0
    %14 = vsyncpa [#allocation5], 0
    %15 = vsyncpa [#allocation11], 0
    // Predicated region
    $region2: #{tpu_custom_call.1} parent=1 // pred_check
      _
    $region3: #{tpu_custom_call.1} parent=1 // pred_check_branch
      %17 = sbr.rel (0) target = $region5
    $region4: #{tpu_custom_call.1} parent=1 // pred_region
      %s19 = ssub.s32 256, 256
      %20 = vsyncadd [#allocation4], %s19
      %s22 = sshll.u32 [#allocation3], 4
      %s23 = int_to_ptr.vmem [resolvable:$true] %s22
      %25 = dma.hbm_to_vmem [thread:$0]  %s0, 256, %s23, [#allocation4]
    $region5: #{tpu_custom_call.1} parent=1 // pred_fallthru
      _
    // Predicated region
    $region6: #{tpu_custom_call.1} parent=1 // pred_check
      _
    $region7: #{tpu_custom_call.1} parent=1 // pred_check_branch
      %27 = sbr.rel (0) target = $region9
    $region8: #{tpu_custom_call.1} parent=1 // pred_region
      %s29 = ssub.s32 8192, 8192
      %30 = vsyncadd [#allocation7], %s29
      %s31 = sshll.u32 [#allocation6], 4
      %s32 = int_to_ptr.vmem [resolvable:$true] %s31
      %37 = dma.hbm_to_vmem [thread:$0]  %s1, 8192, %s32, [#allocation7], 64, 64, 4
    $region9: #{tpu_custom_call.1} parent=1 // pred_fallthru
      _
    // Predicated region
    $region10: #{tpu_custom_call.1} parent=1 // pred_check
      _
    $region11: #{tpu_custom_call.1} parent=1 // pred_check_branch
      %39 = sbr.rel (0) target = $region13
    $region12: #{tpu_custom_call.1} parent=1 // pred_region
      _
    $region13: #{tpu_custom_call.1} parent=1 // pred_fallthru
      _
    // Predicated region
    $region14: #{tpu_custom_call.1} parent=1 // pred_check
      _
    $region15: #{tpu_custom_call.1} parent=1 // pred_check_branch
      %41 = sbr.rel (0) target = $region17
    $region16: #{tpu_custom_call.1} parent=1 // pred_region
      %s43 = ssub.s32 2048, 2048
      %44 = vsyncadd [#allocation7], %s43
      %s45 = sshll.u32 [#allocation8], 4
      %s46 = int_to_ptr.vmem [resolvable:$true] %s45
      %51 = dma.hbm_to_vmem [thread:$0]  %s3, 2048, %s46, [#allocation7], 128, 128, 8
    $region17: #{tpu_custom_call.1} parent=1 // pred_fallthru
      _
    // Predicated region
    $region18: #{tpu_custom_call.1} parent=1 // pred_check
      _
    $region19: #{tpu_custom_call.1} parent=1 // pred_check_branch
      %53 = sbr.rel (0) target = $region21
    $region20: #{tpu_custom_call.1} parent=1 // pred_region
      _
    $region21: #{tpu_custom_call.1} parent=1 // pred_fallthru
      _
    // Predicated region
    $region22: #{tpu_custom_call.1} parent=1 // pred_check
      _
    $region23: #{tpu_custom_call.1} parent=1 // pred_check_branch
      %55 = sbr.rel (0) target = $region25
    $region24: #{tpu_custom_call.1} parent=1 // pred_region
      %56 = dma.done [#allocation4], 256
    $region25: #{tpu_custom_call.1} parent=1 // pred_fallthru
      _
    // Predicated region
    $region26: #{tpu_custom_call.1} parent=1 // pred_check
      _
    $region27: #{tpu_custom_call.1} parent=1 // pred_check_branch
      %58 = sbr.rel (0) target = $region29
    $region28: #{tpu_custom_call.1} parent=1 // pred_region
      %59 = dma.done [#allocation7], 8192
    $region29: #{tpu_custom_call.1} parent=1 // pred_fallthru
      _
    // Predicated region
    $region30: #{tpu_custom_call.1} parent=1 // pred_check
      _
    $region31: #{tpu_custom_call.1} parent=1 // pred_check_branch
      %61 = sbr.rel (0) target = $region33
    $region32: #{tpu_custom_call.1} parent=1 // pred_region
      %62 = dma.done [#allocation7], 2048
    $region33: #{tpu_custom_call.1} parent=1 // pred_fallthru
      _
    %p64 = scmp.eq.s32.totalorder 0, 0
    // Predicated region
    $region34: #{tpu_custom_call.1} parent=1 // pred_check
      %p65 = pneg %p64
    $region35: #{tpu_custom_call.1} parent=1 // pred_check_branch
      %67 = sbr.rel (%p65) target = $region37
    $region36: #{tpu_custom_call.1} parent=1 // pred_region
      %68 = vst [vmem:[#allocation2] sm:$0x3] 0.0
    $region37: #{tpu_custom_call.1} parent=1 // pred_fallthru
      _
    %v69 = vld [vmem:[#allocation3] sm:$0xff]
    %v70 = vld [vmem:[#allocation3 + $0x8] sm:$0xff]
    %v73 = vcombine.high %v69, %v69
    %v75 = vunpack.c.l.s4 1983009808
    %v76 = vunpack.c.0.s8 %v75
    %v77 = vlaneseq
    %v78 = vshrl.u32 %v77, 7
    %v79 = vsub.s32 %v76, %v78
    %v80 = vrot.slane %v69, %v79
    %v82 = vunpack.c.l.s4 1983009808
    %v83 = vunpack.c.0.s8 %v82
    %v84 = vlaneseq
    %v85 = vshrl.u32 %v84, 7
    %v86 = vsub.s32 %v83, %v85
    %v87 = vrot.slane %v73, %v86
    %v88 = vcombine.high %v80, %v80
    %v89 = vcombine.high %v87, %v87
    %v90 = vcombine.high %v70, %v70
    %v92 = vunpack.c.l.s4 1983009808
    %v93 = vunpack.c.0.s8 %v92
    %v94 = vlaneseq
    %v95 = vshrl.u32 %v94, 7
    %v96 = vsub.s32 %v93, %v95
    %v97 = vrot.slane %v70, %v96
    %v99 = vunpack.c.l.s4 1983009808
    %v100 = vunpack.c.0.s8 %v99
    %v101 = vlaneseq
    %v102 = vshrl.u32 %v101, 7
    %v103 = vsub.s32 %v100, %v102
    %v104 = vrot.slane %v90, %v103
    %v105 = vcombine.high %v97, %v97
    %v106 = vcombine.high %v104, %v104
    %v115 = vpack.c.bf16 %v80, %v80
    %v116 = vpack.c.bf16 %v88, %v88
    %v117 = vpack.c.bf16 %v87, %v87
    %v118 = vpack.c.bf16 %v89, %v89
    %v119 = vpack.c.bf16 %v97, %v97
    %v120 = vpack.c.bf16 %v105, %v105
    %v121 = vpack.c.bf16 %v104, %v104
    %v122 = vpack.c.bf16 %v106, %v106
    %v123 = vld [vmem:[#allocation6] sm:$0xf]
    %v124 = vld [vmem:[#allocation6 + $0x4] sm:$0xf]
    %v125 = vld [vmem:[#allocation6 + $0x8] sm:$0xf]
    %v126 = vld [vmem:[#allocation6 + $0xc] sm:$0xf]
    %v127 = vld [vmem:[#allocation6 + $0x10] sm:$0xf]
    %v128 = vld [vmem:[#allocation6 + $0x14] sm:$0xf]
    %v129 = vld [vmem:[#allocation6 + $0x18] sm:$0xf]
    %v130 = vld [vmem:[#allocation6 + $0x1c] sm:$0xf]
    %v131 = vld [vmem:[#allocation6 + $0x20] sm:$0xf]
    %v132 = vld [vmem:[#allocation6 + $0x24] sm:$0xf]
    %v133 = vld [vmem:[#allocation6 + $0x28] sm:$0xf]
    %v134 = vld [vmem:[#allocation6 + $0x2c] sm:$0xf]
    %v135 = vld [vmem:[#allocation6 + $0x30] sm:$0xf]
    %v136 = vld [vmem:[#allocation6 + $0x34] sm:$0xf]
    %v137 = vld [vmem:[#allocation6 + $0x38] sm:$0xf]
    %v138 = vld [vmem:[#allocation6 + $0x3c] sm:$0xf]
    %v139 = vld [vmem:[#allocation6 + $0x40] sm:$0xf]
    %v140 = vld [vmem:[#allocation6 + $0x44] sm:$0xf]
    %v141 = vld [vmem:[#allocation6 + $0x48] sm:$0xf]
    %v142 = vld [vmem:[#allocation6 + $0x4c] sm:$0xf]
    %v143 = vld [vmem:[#allocation6 + $0x50] sm:$0xf]
    %v144 = vld [vmem:[#allocation6 + $0x54] sm:$0xf]
    %v145 = vld [vmem:[#allocation6 + $0x58] sm:$0xf]
    %v146 = vld [vmem:[#allocation6 + $0x5c] sm:$0xf]
    %v147 = vld [vmem:[#allocation6 + $0x60] sm:$0xf]
    %v148 = vld [vmem:[#allocation6 + $0x64] sm:$0xf]
    %v149 = vld [vmem:[#allocation6 + $0x68] sm:$0xf]
    %v150 = vld [vmem:[#allocation6 + $0x6c] sm:$0xf]
    %v151 = vld [vmem:[#allocation6 + $0x70] sm:$0xf]
    %v152 = vld [vmem:[#allocation6 + $0x74] sm:$0xf]
    %v153 = vld [vmem:[#allocation6 + $0x78] sm:$0xf]
    %v154 = vld [vmem:[#allocation6 + $0x7c] sm:$0xf]
    %v155 = vld [vmem:[#allocation6 + $0x80] sm:$0xf]
    %v156 = vld [vmem:[#allocation6 + $0x84] sm:$0xf]
    %v157 = vld [vmem:[#allocation6 + $0x88] sm:$0xf]
    %v158 = vld [vmem:[#allocation6 + $0x8c] sm:$0xf]
    %v159 = vld [vmem:[#allocation6 + $0x90] sm:$0xf]
    %v160 = vld [vmem:[#allocation6 + $0x94] sm:$0xf]
    %v161 = vld [vmem:[#allocation6 + $0x98] sm:$0xf]
    %v162 = vld [vmem:[#allocation6 + $0x9c] sm:$0xf]
    %v163 = vld [vmem:[#allocation6 + $0xa0] sm:$0xf]
    %v164 = vld [vmem:[#allocation6 + $0xa4] sm:$0xf]
    %v165 = vld [vmem:[#allocation6 + $0xa8] sm:$0xf]
    %v166 = vld [vmem:[#allocation6 + $0xac] sm:$0xf]
    %v167 = vld [vmem:[#allocation6 + $0xb0] sm:$0xf]
    %v168 = vld [vmem:[#allocation6 + $0xb4] sm:$0xf]
    %v169 = vld [vmem:[#allocation6 + $0xb8] sm:$0xf]
    %v170 = vld [vmem:[#allocation6 + $0xbc] sm:$0xf]
    %v171 = vld [vmem:[#allocation6 + $0xc0] sm:$0xf]
    %v172 = vld [vmem:[#allocation6 + $0xc4] sm:$0xf]
    %v173 = vld [vmem:[#allocation6 + $0xc8] sm:$0xf]
    %v174 = vld [vmem:[#allocation6 + $0xcc] sm:$0xf]
    %v175 = vld [vmem:[#allocation6 + $0xd0] sm:$0xf]
    %v176 = vld [vmem:[#allocation6 + $0xd4] sm:$0xf]
    %v177 = vld [vmem:[#allocation6 + $0xd8] sm:$0xf]
    %v178 = vld [vmem:[#allocation6 + $0xdc] sm:$0xf]
    %v179 = vld [vmem:[#allocation6 + $0xe0] sm:$0xf]
    %v180 = vld [vmem:[#allocation6 + $0xe4] sm:$0xf]
    %v181 = vld [vmem:[#allocation6 + $0xe8] sm:$0xf]
    %v182 = vld [vmem:[#allocation6 + $0xec] sm:$0xf]
    %v183 = vld [vmem:[#allocation6 + $0xf0] sm:$0xf]
    %v184 = vld [vmem:[#allocation6 + $0xf4] sm:$0xf]
    %v185 = vld [vmem:[#allocation6 + $0xf8] sm:$0xf]
    %v186 = vld [vmem:[#allocation6 + $0xfc] sm:$0xf]
    %v187 = vld [vmem:[#allocation6 + $0x100] sm:$0xf]
    %v188 = vld [vmem:[#allocation6 + $0x104] sm:$0xf]
    %v189 = vld [vmem:[#allocation6 + $0x108] sm:$0xf]
    %v190 = vld [vmem:[#allocation6 + $0x10c] sm:$0xf]
    %v191 = vld [vmem:[#allocation6 + $0x110] sm:$0xf]
    %v192 = vld [vmem:[#allocation6 + $0x114] sm:$0xf]
    %v193 = vld [vmem:[#allocation6 + $0x118] sm:$0xf]
    %v194 = vld [vmem:[#allocation6 + $0x11c] sm:$0xf]
    %v195 = vld [vmem:[#allocation6 + $0x120] sm:$0xf]
    %v196 = vld [vmem:[#allocation6 + $0x124] sm:$0xf]
    %v197 = vld [vmem:[#allocation6 + $0x128] sm:$0xf]
    %v198 = vld [vmem:[#allocation6 + $0x12c] sm:$0xf]
    %v199 = vld [vmem:[#allocation6 + $0x130] sm:$0xf]
    %v200 = vld [vmem:[#allocation6 + $0x134] sm:$0xf]
    %v201 = vld [vmem:[#allocation6 + $0x138] sm:$0xf]
    %v202 = vld [vmem:[#allocation6 + $0x13c] sm:$0xf]
    %v203 = vld [vmem:[#allocation6 + $0x140] sm:$0xf]
    %v204 = vld [vmem:[#allocation6 + $0x144] sm:$0xf]
    %v205 = vld [vmem:[#allocation6 + $0x148] sm:$0xf]
    %v206 = vld [vmem:[#allocation6 + $0x14c] sm:$0xf]
    %v207 = vld [vmem:[#allocation6 + $0x150] sm:$0xf]
    %v208 = vld [vmem:[#allocation6 + $0x154] sm:$0xf]
    %v209 = vld [vmem:[#allocation6 + $0x158] sm:$0xf]
    %v210 = vld [vmem:[#allocation6 + $0x15c] sm:$0xf]
    %v211 = vld [vmem:[#allocation6 + $0x160] sm:$0xf]
    %v212 = vld [vmem:[#allocation6 + $0x164] sm:$0xf]
    %v213 = vld [vmem:[#allocation6 + $0x168] sm:$0xf]
    %v214 = vld [vmem:[#allocation6 + $0x16c] sm:$0xf]
    %v215 = vld [vmem:[#allocation6 + $0x170] sm:$0xf]
    %v216 = vld [vmem:[#allocation6 + $0x174] sm:$0xf]
    %v217 = vld [vmem:[#allocation6 + $0x178] sm:$0xf]
    %v218 = vld [vmem:[#allocation6 + $0x17c] sm:$0xf]
    %v219 = vld [vmem:[#allocation6 + $0x180] sm:$0xf]
    %v220 = vld [vmem:[#allocation6 + $0x184] sm:$0xf]
    %v221 = vld [vmem:[#allocation6 + $0x188] sm:$0xf]
    %v222 = vld [vmem:[#allocation6 + $0x18c] sm:$0xf]
    %v223 = vld [vmem:[#allocation6 + $0x190] sm:$0xf]
    %v224 = vld [vmem:[#allocation6 + $0x194] sm:$0xf]
    %v225 = vld [vmem:[#allocation6 + $0x198] sm:$0xf]
    %v226 = vld [vmem:[#allocation6 + $0x19c] sm:$0xf]
    %v227 = vld [vmem:[#allocation6 + $0x1a0] sm:$0xf]
    %v228 = vld [vmem:[#allocation6 + $0x1a4] sm:$0xf]
    %v229 = vld [vmem:[#allocation6 + $0x1a8] sm:$0xf]
    %v230 = vld [vmem:[#allocation6 + $0x1ac] sm:$0xf]
    %v231 = vld [vmem:[#allocation6 + $0x1b0] sm:$0xf]
    %v232 = vld [vmem:[#allocation6 + $0x1b4] sm:$0xf]
    %v233 = vld [vmem:[#allocation6 + $0x1b8] sm:$0xf]
    %v234 = vld [vmem:[#allocation6 + $0x1bc] sm:$0xf]
    %v235 = vld [vmem:[#allocation6 + $0x1c0] sm:$0xf]
    %v236 = vld [vmem:[#allocation6 + $0x1c4] sm:$0xf]
    %v237 = vld [vmem:[#allocation6 + $0x1c8] sm:$0xf]
    %v238 = vld [vmem:[#allocation6 + $0x1cc] sm:$0xf]
    %v239 = vld [vmem:[#allocation6 + $0x1d0] sm:$0xf]
    %v240 = vld [vmem:[#allocation6 + $0x1d4] sm:$0xf]
    %v241 = vld [vmem:[#allocation6 + $0x1d8] sm:$0xf]
    %v242 = vld [vmem:[#allocation6 + $0x1dc] sm:$0xf]
    %v243 = vld [vmem:[#allocation6 + $0x1e0] sm:$0xf]
    %v244 = vld [vmem:[#allocation6 + $0x1e4] sm:$0xf]
    %v245 = vld [vmem:[#allocation6 + $0x1e8] sm:$0xf]
    %v246 = vld [vmem:[#allocation6 + $0x1ec] sm:$0xf]
    %v247 = vld [vmem:[#allocation6 + $0x1f0] sm:$0xf]
    %v248 = vld [vmem:[#allocation6 + $0x1f4] sm:$0xf]
    %v249 = vld [vmem:[#allocation6 + $0x1f8] sm:$0xf]
    %v250 = vld [vmem:[#allocation6 + $0x1fc] sm:$0xf]
    %v251 = vld [vmem:[#allocation2] sm:$0x3]
    %v380 = vunpack.c.l.b16 %v123
    %v381 = vunpack.c.l.b16 %v124
    %v382 = vunpack.c.l.b16 %v125
    %v383 = vunpack.c.l.b16 %v126
    %v384 = vunpack.c.l.b16 %v127
    %v385 = vunpack.c.l.b16 %v128
    %v386 = vunpack.c.l.b16 %v129
    %v387 = vunpack.c.l.b16 %v130
    %v388 = vunpack.c.l.b16 %v131
    %v389 = vunpack.c.l.b16 %v132
    %v390 = vunpack.c.l.b16 %v133
    %v391 = vunpack.c.l.b16 %v134
    %v392 = vunpack.c.l.b16 %v135
    %v393 = vunpack.c.l.b16 %v136
    %v394 = vunpack.c.l.b16 %v137
    %v395 = vunpack.c.l.b16 %v138
    %v396 = vunpack.c.l.b16 %v139
    %v397 = vunpack.c.l.b16 %v140
    %v398 = vunpack.c.l.b16 %v141
    %v399 = vunpack.c.l.b16 %v142
    %v400 = vunpack.c.l.b16 %v143
    %v401 = vunpack.c.l.b16 %v144
    %v402 = vunpack.c.l.b16 %v145
    %v403 = vunpack.c.l.b16 %v146
    %v404 = vunpack.c.l.b16 %v147
    %v405 = vunpack.c.l.b16 %v148
    %v406 = vunpack.c.l.b16 %v149
    %v407 = vunpack.c.l.b16 %v150
    %v408 = vunpack.c.l.b16 %v151
    %v409 = vunpack.c.l.b16 %v152
    %v410 = vunpack.c.l.b16 %v153
    %v411 = vunpack.c.l.b16 %v154
    %v412 = vunpack.c.l.b16 %v155
    %v413 = vunpack.c.l.b16 %v156
    %v414 = vunpack.c.l.b16 %v157
    %v415 = vunpack.c.l.b16 %v158
    %v416 = vunpack.c.l.b16 %v159
    %v417 = vunpack.c.l.b16 %v160
    %v418 = vunpack.c.l.b16 %v161
    %v419 = vunpack.c.l.b16 %v162
    %v420 = vunpack.c.l.b16 %v163
    %v421 = vunpack.c.l.b16 %v164
    %v422 = vunpack.c.l.b16 %v165
    %v423 = vunpack.c.l.b16 %v166
    %v424 = vunpack.c.l.b16 %v167
    %v425 = vunpack.c.l.b16 %v168
    %v426 = vunpack.c.l.b16 %v169
    %v427 = vunpack.c.l.b16 %v170
    %v428 = vunpack.c.l.b16 %v171
    %v429 = vunpack.c.l.b16 %v172
    %v430 = vunpack.c.l.b16 %v173
    %v431 = vunpack.c.l.b16 %v174
    %v432 = vunpack.c.l.b16 %v175
    %v433 = vunpack.c.l.b16 %v176
    %v434 = vunpack.c.l.b16 %v177
    %v435 = vunpack.c.l.b16 %v178
    %v436 = vunpack.c.l.b16 %v179
    %v437 = vunpack.c.l.b16 %v180
    %v438 = vunpack.c.l.b16 %v181
    %v439 = vunpack.c.l.b16 %v182
    %v440 = vunpack.c.l.b16 %v183
    %v441 = vunpack.c.l.b16 %v184
    %v442 = vunpack.c.l.b16 %v185
    %v443 = vunpack.c.l.b16 %v186
    %v444 = vunpack.c.l.b16 %v187
    %v445 = vunpack.c.l.b16 %v188
    %v446 = vunpack.c.l.b16 %v189
    %v447 = vunpack.c.l.b16 %v190
    %v448 = vunpack.c.l.b16 %v191
    %v449 = vunpack.c.l.b16 %v192
    %v450 = vunpack.c.l.b16 %v193
    %v451 = vunpack.c.l.b16 %v194
    %v452 = vunpack.c.l.b16 %v195
    %v453 = vunpack.c.l.b16 %v196
    %v454 = vunpack.c.l.b16 %v197
    %v455 = vunpack.c.l.b16 %v198
    %v456 = vunpack.c.l.b16 %v199
    %v457 = vunpack.c.l.b16 %v200
    %v458 = vunpack.c.l.b16 %v201
    %v459 = vunpack.c.l.b16 %v202
    %v460 = vunpack.c.l.b16 %v203
    %v461 = vunpack.c.l.b16 %v204
    %v462 = vunpack.c.l.b16 %v205
    %v463 = vunpack.c.l.b16 %v206
    %v464 = vunpack.c.l.b16 %v207
    %v465 = vunpack.c.l.b16 %v208
    %v466 = vunpack.c.l.b16 %v209
    %v467 = vunpack.c.l.b16 %v210
    %v468 = vunpack.c.l.b16 %v211
    %v469 = vunpack.c.l.b16 %v212
    %v470 = vunpack.c.l.b16 %v213
    %v471 = vunpack.c.l.b16 %v214
    %v472 = vunpack.c.l.b16 %v215
    %v473 = vunpack.c.l.b16 %v216
    %v474 = vunpack.c.l.b16 %v217
    %v475 = vunpack.c.l.b16 %v218
    %v476 = vunpack.c.l.b16 %v219
    %v477 = vunpack.c.l.b16 %v220
    %v478 = vunpack.c.l.b16 %v221
    %v479 = vunpack.c.l.b16 %v222
    %v480 = vunpack.c.l.b16 %v223
    %v481 = vunpack.c.l.b16 %v224
    %v482 = vunpack.c.l.b16 %v225
    %v483 = vunpack.c.l.b16 %v226
    %v484 = vunpack.c.l.b16 %v227
    %v485 = vunpack.c.l.b16 %v228
    %v486 = vunpack.c.l.b16 %v229
    %v487 = vunpack.c.l.b16 %v230
    %v488 = vunpack.c.l.b16 %v231
    %v489 = vunpack.c.l.b16 %v232
    %v490 = vunpack.c.l.b16 %v233
    %v491 = vunpack.c.l.b16 %v234
    %v492 = vunpack.c.l.b16 %v235
    %v493 = vunpack.c.l.b16 %v236
    %v494 = vunpack.c.l.b16 %v237
    %v495 = vunpack.c.l.b16 %v238
    %v496 = vunpack.c.l.b16 %v239
    %v497 = vunpack.c.l.b16 %v240
    %v498 = vunpack.c.l.b16 %v241
    %v499 = vunpack.c.l.b16 %v242
    %v500 = vunpack.c.l.b16 %v243
    %v501 = vunpack.c.l.b16 %v244
    %v502 = vunpack.c.l.b16 %v245
    %v503 = vunpack.c.l.b16 %v246
    %v504 = vunpack.c.l.b16 %v247
    %v505 = vunpack.c.l.b16 %v248
    %v506 = vunpack.c.l.b16 %v249
    %v507 = vunpack.c.l.b16 %v250
    %v508 = vpack.c.b16 %v381, %v380
    %v509 = vpack.c.b16 %v383, %v382
    %v510 = vpack.c.b16 %v385, %v384
    %v511 = vpack.c.b16 %v387, %v386
    %v512 = vpack.c.b16 %v389, %v388
    %v513 = vpack.c.b16 %v391, %v390
    %v514 = vpack.c.b16 %v393, %v392
    %v515 = vpack.c.b16 %v395, %v394
    %v516 = vpack.c.b16 %v397, %v396
    %v517 = vpack.c.b16 %v399, %v398
    %v518 = vpack.c.b16 %v401, %v400
    %v519 = vpack.c.b16 %v403, %v402
    %v520 = vpack.c.b16 %v405, %v404
    %v521 = vpack.c.b16 %v407, %v406
    %v522 = vpack.c.b16 %v409, %v408
    %v523 = vpack.c.b16 %v411, %v410
    %v524 = vpack.c.b16 %v413, %v412
    %v525 = vpack.c.b16 %v415, %v414
    %v526 = vpack.c.b16 %v417, %v416
    %v527 = vpack.c.b16 %v419, %v418
    %v528 = vpack.c.b16 %v421, %v420
    %v529 = vpack.c.b16 %v423, %v422
    %v530 = vpack.c.b16 %v425, %v424
    %v531 = vpack.c.b16 %v427, %v426
    %v532 = vpack.c.b16 %v429, %v428
    %v533 = vpack.c.b16 %v431, %v430
    %v534 = vpack.c.b16 %v433, %v432
    %v535 = vpack.c.b16 %v435, %v434
    %v536 = vpack.c.b16 %v437, %v436
    %v537 = vpack.c.b16 %v439, %v438
    %v538 = vpack.c.b16 %v441, %v440
    %v539 = vpack.c.b16 %v443, %v442
    %v540 = vpack.c.b16 %v445, %v444
    %v541 = vpack.c.b16 %v447, %v446
    %v542 = vpack.c.b16 %v449, %v448
    %v543 = vpack.c.b16 %v451, %v450
    %v544 = vpack.c.b16 %v453, %v452
    %v545 = vpack.c.b16 %v455, %v454
    %v546 = vpack.c.b16 %v457, %v456
    %v547 = vpack.c.b16 %v459, %v458
    %v548 = vpack.c.b16 %v461, %v460
    %v549 = vpack.c.b16 %v463, %v462
    %v550 = vpack.c.b16 %v465, %v464
    %v551 = vpack.c.b16 %v467, %v466
    %v552 = vpack.c.b16 %v469, %v468
    %v553 = vpack.c.b16 %v471, %v470
    %v554 = vpack.c.b16 %v473, %v472
    %v555 = vpack.c.b16 %v475, %v474
    %v556 = vpack.c.b16 %v477, %v476
    %v557 = vpack.c.b16 %v479, %v478
    %v558 = vpack.c.b16 %v481, %v480
    %v559 = vpack.c.b16 %v483, %v482
    %v560 = vpack.c.b16 %v485, %v484
    %v561 = vpack.c.b16 %v487, %v486
    %v562 = vpack.c.b16 %v489, %v488
    %v563 = vpack.c.b16 %v491, %v490
    %v564 = vpack.c.b16 %v493, %v492
    %v565 = vpack.c.b16 %v495, %v494
    %v566 = vpack.c.b16 %v497, %v496
    %v567 = vpack.c.b16 %v499, %v498
    %v568 = vpack.c.b16 %v501, %v500
    %v569 = vpack.c.b16 %v503, %v502
    %v570 = vpack.c.b16 %v505, %v504
    %v571 = vpack.c.b16 %v507, %v506
    %636 = vmatprep.subr.bf16.mxu0 0
    %637 = vmatpush1.bf16.msra.mxu0 %v508
    %638 = vmatprep.subr.bf16.mxu0 0
    %639 = vmatpush1.bf16.msra.mxu0 %v509
    %640 = vmatprep.subr.bf16.mxu0 0
    %641 = vmatpush1.bf16.msra.mxu0 %v510
    %642 = vmatprep.subr.bf16.mxu0 0
    %643 = vmatpush1.bf16.msra.mxu0 %v511
    %644 = vmatprep.subr.bf16.mxu0 0
    %645 = vmatpush1.bf16.msra.mxu0 %v512
    %646 = vmatprep.subr.bf16.mxu0 0
    %647 = vmatpush1.bf16.msra.mxu0 %v513
    %648 = vmatprep.subr.bf16.mxu0 0
    %649 = vmatpush1.bf16.msra.mxu0 %v514
    %650 = vmatprep.subr.bf16.mxu0 0
    %651 = vmatpush1.bf16.msra.mxu0 %v515
    %652 = vmatprep.subr.bf16.mxu0 0
    %653 = vmatpush1.bf16.msra.mxu0 %v516
    %654 = vmatprep.subr.bf16.mxu0 0
    %655 = vmatpush1.bf16.msra.mxu0 %v517
    %656 = vmatprep.subr.bf16.mxu0 0
    %657 = vmatpush1.bf16.msra.mxu0 %v518
    %658 = vmatprep.subr.bf16.mxu0 0
    %659 = vmatpush1.bf16.msra.mxu0 %v519
    %660 = vmatprep.subr.bf16.mxu0 0
    %661 = vmatpush1.bf16.msra.mxu0 %v520
    %662 = vmatprep.subr.bf16.mxu0 0
    %663 = vmatpush1.bf16.msra.mxu0 %v521
    %664 = vmatprep.subr.bf16.mxu0 0
    %665 = vmatpush1.bf16.msra.mxu0 %v522
    %666 = vmatprep.subr.bf16.mxu0 0
    %667 = vmatpush1.bf16.msra.mxu0 %v523
    %668 = vmatprep.mubr.bf16.mxu0 %v116
    %669 = vmatmul.mubr.bf16.gmra.mrb[0].mxu0 %v115
    %v670 = vpop.f32.mrb[0].mxu0
    %v671 = vadd.f32 0.0, %v670
    %v672 = vpop.f32.mrb[0].mxu0
    %v673 = vpop.f32.mrb[0].mxu0
    %v674 = vpop.f32.mrb[0].mxu0
    %675 = vdwg.mxu0
    %676 = vmatprep.subr.bf16.mxu0 0
    %677 = vmatpush1.bf16.msra.mxu0 %v524
    %678 = vmatprep.subr.bf16.mxu0 0
    %679 = vmatpush1.bf16.msra.mxu0 %v525
    %680 = vmatprep.subr.bf16.mxu0 0
    %681 = vmatpush1.bf16.msra.mxu0 %v526
    %682 = vmatprep.subr.bf16.mxu0 0
    %683 = vmatpush1.bf16.msra.mxu0 %v527
    %684 = vmatprep.subr.bf16.mxu0 0
    %685 = vmatpush1.bf16.msra.mxu0 %v528
    %686 = vmatprep.subr.bf16.mxu0 0
    %687 = vmatpush1.bf16.msra.mxu0 %v529
    %688 = vmatprep.subr.bf16.mxu0 0
    %689 = vmatpush1.bf16.msra.mxu0 %v530
    %690 = vmatprep.subr.bf16.mxu0 0
    %691 = vmatpush1.bf16.msra.mxu0 %v531
    %692 = vmatprep.subr.bf16.mxu0 0
    %693 = vmatpush1.bf16.msra.mxu0 %v532
    %694 = vmatprep.subr.bf16.mxu0 0
    %695 = vmatpush1.bf16.msra.mxu0 %v533
    %696 = vmatprep.subr.bf16.mxu0 0
    %697 = vmatpush1.bf16.msra.mxu0 %v534
    %698 = vmatprep.subr.bf16.mxu0 0
    %699 = vmatpush1.bf16.msra.mxu0 %v535
    %700 = vmatprep.subr.bf16.mxu0 0
    %701 = vmatpush1.bf16.msra.mxu0 %v536
    %702 = vmatprep.subr.bf16.mxu0 0
    %703 = vmatpush1.bf16.msra.mxu0 %v537
    %704 = vmatprep.subr.bf16.mxu0 0
    %705 = vmatpush1.bf16.msra.mxu0 %v538
    %706 = vmatprep.subr.bf16.mxu0 0
    %707 = vmatpush1.bf16.msra.mxu0 %v539
    %708 = vmatprep.mubr.bf16.mxu0 %v118
    %709 = vmatmul.mubr.bf16.gmra.mrb[0].mxu0 %v117
    %v710 = vpop.f32.mrb[0].mxu0
    %v711 = vadd.f32 %v671, %v710
    %v712 = vpop.f32.mrb[0].mxu0
    %v713 = vpop.f32.mrb[0].mxu0
    %v714 = vpop.f32.mrb[0].mxu0
    %715 = vdwg.mxu0
    %716 = vmatprep.subr.bf16.mxu0 0
    %717 = vmatpush1.bf16.msra.mxu0 %v540
    %718 = vmatprep.subr.bf16.mxu0 0
    %719 = vmatpush1.bf16.msra.mxu0 %v541
    %720 = vmatprep.subr.bf16.mxu0 0
    %721 = vmatpush1.bf16.msra.mxu0 %v542
    %722 = vmatprep.subr.bf16.mxu0 0
    %723 = vmatpush1.bf16.msra.mxu0 %v543
    %724 = vmatprep.subr.bf16.mxu0 0
    %725 = vmatpush1.bf16.msra.mxu0 %v544
    %726 = vmatprep.subr.bf16.mxu0 0
    %727 = vmatpush1.bf16.msra.mxu0 %v545
    %728 = vmatprep.subr.bf16.mxu0 0
    %729 = vmatpush1.bf16.msra.mxu0 %v546
    %730 = vmatprep.subr.bf16.mxu0 0
    %731 = vmatpush1.bf16.msra.mxu0 %v547
    %732 = vmatprep.subr.bf16.mxu0 0
    %733 = vmatpush1.bf16.msra.mxu0 %v548
    %734 = vmatprep.subr.bf16.mxu0 0
    %735 = vmatpush1.bf16.msra.mxu0 %v549
    %736 = vmatprep.subr.bf16.mxu0 0
    %737 = vmatpush1.bf16.msra.mxu0 %v550
    %738 = vmatprep.subr.bf16.mxu0 0
    %739 = vmatpush1.bf16.msra.mxu0 %v551
    %740 = vmatprep.subr.bf16.mxu0 0
    %741 = vmatpush1.bf16.msra.mxu0 %v552
    %742 = vmatprep.subr.bf16.mxu0 0
    %743 = vmatpush1.bf16.msra.mxu0 %v553
    %744 = vmatprep.subr.bf16.mxu0 0
    %745 = vmatpush1.bf16.msra.mxu0 %v554
    %746 = vmatprep.subr.bf16.mxu0 0
    %747 = vmatpush1.bf16.msra.mxu0 %v555
    %748 = vmatprep.mubr.bf16.mxu0 %v120
    %749 = vmatmul.mubr.bf16.gmra.mrb[0].mxu0 %v119
    %v750 = vpop.f32.mrb[0].mxu0
    %v751 = vadd.f32 %v711, %v750
    %v752 = vpop.f32.mrb[0].mxu0
    %v753 = vpop.f32.mrb[0].mxu0
    %v754 = vpop.f32.mrb[0].mxu0
    %755 = vdwg.mxu0
    %756 = vmatprep.subr.bf16.mxu0 0
    %757 = vmatpush1.bf16.msra.mxu0 %v556
    %758 = vmatprep.subr.bf16.mxu0 0
    %759 = vmatpush1.bf16.msra.mxu0 %v557
    %760 = vmatprep.subr.bf16.mxu0 0
    %761 = vmatpush1.bf16.msra.mxu0 %v558
    %762 = vmatprep.subr.bf16.mxu0 0
    %763 = vmatpush1.bf16.msra.mxu0 %v559
    %764 = vmatprep.subr.bf16.mxu0 0
    %765 = vmatpush1.bf16.msra.mxu0 %v560
    %766 = vmatprep.subr.bf16.mxu0 0
    %767 = vmatpush1.bf16.msra.mxu0 %v561
    %768 = vmatprep.subr.bf16.mxu0 0
    %769 = vmatpush1.bf16.msra.mxu0 %v562
    %770 = vmatprep.subr.bf16.mxu0 0
    %771 = vmatpush1.bf16.msra.mxu0 %v563
    %772 = vmatprep.subr.bf16.mxu0 0
    %773 = vmatpush1.bf16.msra.mxu0 %v564
    %774 = vmatprep.subr.bf16.mxu0 0
    %775 = vmatpush1.bf16.msra.mxu0 %v565
    %776 = vmatprep.subr.bf16.mxu0 0
    %777 = vmatpush1.bf16.msra.mxu0 %v566
    %778 = vmatprep.subr.bf16.mxu0 0
    %779 = vmatpush1.bf16.msra.mxu0 %v567
    %780 = vmatprep.subr.bf16.mxu0 0
    %781 = vmatpush1.bf16.msra.mxu0 %v568
    %782 = vmatprep.subr.bf16.mxu0 0
    %783 = vmatpush1.bf16.msra.mxu0 %v569
    %784 = vmatprep.subr.bf16.mxu0 0
    %785 = vmatpush1.bf16.msra.mxu0 %v570
    %786 = vmatprep.subr.bf16.mxu0 0
    %787 = vmatpush1.bf16.msra.mxu0 %v571
    %788 = vmatprep.mubr.bf16.mxu0 %v122
    %789 = vmatmul.mubr.bf16.gmra.mrb[0].mxu0 %v121
    %v790 = vpop.f32.mrb[0].mxu0
    %v791 = vadd.f32 %v751, %v790
    %v792 = vpop.f32.mrb[0].mxu0
    %v793 = vpop.f32.mrb[0].mxu0
    %v794 = vpop.f32.mrb[0].mxu0
    %795 = vdwg.mxu0
    %v796 = vadd.f32 %v251, %v791
    %797 = vst [vmem:[#allocation2] sm:$0x3] %v796
    // Predicated region
    $region38: #{tpu_custom_call.1} parent=1 // pred_check
      %p798 = pneg %p64
    $region39: #{tpu_custom_call.1} parent=1 // pred_check_branch
      %800 = sbr.rel (%p798) target = $region41
    $region40: #{tpu_custom_call.1} parent=1 // pred_region
      %v801 = vld [vmem:[#allocation2] sm:$0x3]
      %v802 = vld [vmem:[%s2] sm:$0x1]
      %v804 = vlaneseq
      %v805 = vshrl.u32 %v804, 7
      %v806 = vsub.s32 0, %v805
      %v807 = vrot.slane %v802, %v806
      %v809 = vadd.f32 %v801, %v807
      %v810 = vmax.f32 %v809, 0.0
      %v811 = vpack.c.bf16 %v810, %v810
      %v812 = vld [vmem:[#allocation8] sm:$0xff]
      %v813 = vld [vmem:[#allocation8 + $0x8] sm:$0xff]
      %v814 = vld [vmem:[#allocation8 + $0x10] sm:$0xff]
      %v815 = vld [vmem:[#allocation8 + $0x18] sm:$0xff]
      %v816 = vld [vmem:[#allocation8 + $0x20] sm:$0xff]
      %v817 = vld [vmem:[#allocation8 + $0x28] sm:$0xff]
      %v818 = vld [vmem:[#allocation8 + $0x30] sm:$0xff]
      %v819 = vld [vmem:[#allocation8 + $0x38] sm:$0xff]
      %v820 = vld [vmem:[#allocation8 + $0x40] sm:$0xff]
      %v821 = vld [vmem:[#allocation8 + $0x48] sm:$0xff]
      %v822 = vld [vmem:[#allocation8 + $0x50] sm:$0xff]
      %v823 = vld [vmem:[#allocation8 + $0x58] sm:$0xff]
      %v824 = vld [vmem:[#allocation8 + $0x60] sm:$0xff]
      %v825 = vld [vmem:[#allocation8 + $0x68] sm:$0xff]
      %v826 = vld [vmem:[#allocation8 + $0x70] sm:$0xff]
      %v827 = vld [vmem:[#allocation8 + $0x78] sm:$0xff]
      %v828 = vld [vmem:[%s4] sm:$0x3]
      %v830 = vlaneseq
      %v831 = vshrl.u32 %v830, 7
      %v832 = vsub.s32 0, %v831
      %v833 = vrot.slane %v828, %v832
      %v834 = vlaneseq
      %v835 = vshrl.u32 %v834, 7
      %v836 = vsub.s32 1, %v835
      %v837 = vrot.slane %v828, %v836
      %v856 = vunpack.c.l.b16 %v812
      %v857 = vunpack.c.h.b16 %v812
      %v858 = vunpack.c.l.b16 %v813
      %v859 = vunpack.c.h.b16 %v813
      %v860 = vunpack.c.l.b16 %v814
      %v861 = vunpack.c.h.b16 %v814
      %v862 = vunpack.c.l.b16 %v815
      %v863 = vunpack.c.h.b16 %v815
      %v864 = vunpack.c.l.b16 %v816
      %v865 = vunpack.c.h.b16 %v816
      %v866 = vunpack.c.l.b16 %v817
      %v867 = vunpack.c.h.b16 %v817
      %v868 = vunpack.c.l.b16 %v818
      %v869 = vunpack.c.h.b16 %v818
      %v870 = vunpack.c.l.b16 %v819
      %v871 = vunpack.c.h.b16 %v819
      %v872 = vunpack.c.l.b16 %v820
      %v873 = vunpack.c.h.b16 %v820
      %v874 = vunpack.c.l.b16 %v821
      %v875 = vunpack.c.h.b16 %v821
      %v876 = vunpack.c.l.b16 %v822
      %v877 = vunpack.c.h.b16 %v822
      %v878 = vunpack.c.l.b16 %v823
      %v879 = vunpack.c.h.b16 %v823
      %v880 = vunpack.c.l.b16 %v824
      %v881 = vunpack.c.h.b16 %v824
      %v882 = vunpack.c.l.b16 %v825
      %v883 = vunpack.c.h.b16 %v825
      %v884 = vunpack.c.l.b16 %v826
      %v885 = vunpack.c.h.b16 %v826
      %v886 = vunpack.c.l.b16 %v827
      %v887 = vunpack.c.h.b16 %v827
      %v888 = vpack.c.b16 %v858, %v856
      %v889 = vpack.c.b16 %v859, %v857
      %v890 = vpack.c.b16 %v862, %v860
      %v891 = vpack.c.b16 %v863, %v861
      %v892 = vpack.c.b16 %v866, %v864
      %v893 = vpack.c.b16 %v867, %v865
      %v894 = vpack.c.b16 %v870, %v868
      %v895 = vpack.c.b16 %v871, %v869
      %v896 = vpack.c.b16 %v874, %v872
      %v897 = vpack.c.b16 %v875, %v873
      %v898 = vpack.c.b16 %v878, %v876
      %v899 = vpack.c.b16 %v879, %v877
      %v900 = vpack.c.b16 %v882, %v880
      %v901 = vpack.c.b16 %v883, %v881
      %v902 = vpack.c.b16 %v886, %v884
      %v903 = vpack.c.b16 %v887, %v885
      %920 = vmatprep.subr.bf16.mxu0 %v889
      %921 = vmatpush1.bf16.msra.mxu0 %v888
      %922 = vmatprep.subr.bf16.mxu0 %v891
      %923 = vmatpush1.bf16.msra.mxu0 %v890
      %924 = vmatprep.subr.bf16.mxu0 %v893
      %925 = vmatpush1.bf16.msra.mxu0 %v892
      %926 = vmatprep.subr.bf16.mxu0 %v895
      %927 = vmatpush1.bf16.msra.mxu0 %v894
      %928 = vmatprep.subr.bf16.mxu0 %v897
      %929 = vmatpush1.bf16.msra.mxu0 %v896
      %930 = vmatprep.subr.bf16.mxu0 %v899
      %931 = vmatpush1.bf16.msra.mxu0 %v898
      %932 = vmatprep.subr.bf16.mxu0 %v901
      %933 = vmatpush1.bf16.msra.mxu0 %v900
      %934 = vmatprep.subr.bf16.mxu0 %v903
      %935 = vmatpush1.bf16.msra.mxu0 %v902
      %936 = vmatprep.subr.bf16.mxu0 0
      %937 = vmatpush1.bf16.msra.mxu0 0
      %938 = vmatprep.subr.bf16.mxu0 0
      %939 = vmatpush1.bf16.msra.mxu0 0
      %940 = vmatprep.subr.bf16.mxu0 0
      %941 = vmatpush1.bf16.msra.mxu0 0
      %942 = vmatprep.subr.bf16.mxu0 0
      %943 = vmatpush1.bf16.msra.mxu0 0
      %944 = vmatprep.subr.bf16.mxu0 0
      %945 = vmatpush1.bf16.msra.mxu0 0
      %946 = vmatprep.subr.bf16.mxu0 0
      %947 = vmatpush1.bf16.msra.mxu0 0
      %948 = vmatprep.subr.bf16.mxu0 0
      %949 = vmatpush1.bf16.msra.mxu0 0
      %950 = vmatprep.subr.bf16.mxu0 0
      %951 = vmatpush1.bf16.msra.mxu0 0
      %952 = vmatprep.mubr.bf16.mxu0 0
      %953 = vmatmul.mubr.bf16.gmra.mrb[0].mxu0 %v811
      %v954 = vpop.f32.mrb[0].mxu0
      %v955 = vadd.f32 %v833, %v954
      %v956 = vpop.f32.mrb[0].mxu0
      %v957 = vadd.f32 %v837, %v956
      %v958 = vpop.f32.mrb[0].mxu0
      %v959 = vpop.f32.mrb[0].mxu0
      %960 = vdwg.mxu0
      %vm961 = vcmask 1041408
      %v962 = vsel %vm961, %v957, -inf
      %963 = vmax.xlane.f32.xlu0 %v962
      %v964 = vpop.xlane.xlu0 %963
      %v965 = vsub.f32 %v957, %v964
      %v966 = vmul.f32 %v965, 1.442695
      %v967 = vpow.pop %v966
      %v968 = vsel %vm961, %v967, 0.0
      %969 = vadd.xlane.f32.xlu0 %v968
      %v970 = vpop.xlane.xlu0 %969
      %v971 = vrcp.pop %v970
      %v972 = vmul.f32 %v967, %v971
      %v973 = vadd.f32 %v972, 1e-06
      %974 = vst [vmem:[#allocation9] sm:$0x3] %v955
      %975 = vst [vmem:[#allocation10] sm:$0x3] %v973
    $region41: #{tpu_custom_call.1} parent=1 // pred_fallthru
      _
    // Predicated region
    $region42: #{tpu_custom_call.1} parent=1 // pred_check
      _
    $region43: #{tpu_custom_call.1} parent=1 // pred_check_branch
      %977 = sbr.rel (0) target = $region45
    $region44: #{tpu_custom_call.1} parent=1 // pred_region
      %s979 = ssub.s32 32, 32
      %980 = vsyncadd [#allocation5], %s979
      %s982 = sshll.u32 [#allocation9], 4
      %s983 = int_to_ptr.vmem [resolvable:$true] %s982
      %985 = dma.vmem_to_hbm [thread:$0]  %s983, 32, %s5, [#allocation5]
    $region45: #{tpu_custom_call.1} parent=1 // pred_fallthru
      _
    // Predicated region
    $region46: #{tpu_custom_call.1} parent=1 // pred_check
      _
    $region47: #{tpu_custom_call.1} parent=1 // pred_check_branch
      %987 = sbr.rel (0) target = $region49
    $region48: #{tpu_custom_call.1} parent=1 // pred_region
      %s989 = ssub.s32 32, 32
      %990 = vsyncadd [#allocation11], %s989
      %s992 = sshll.u32 [#allocation10], 4
      %s993 = int_to_ptr.vmem [resolvable:$true] %s992
      %995 = dma.vmem_to_hbm [thread:$0]  %s993, 32, %s6, [#allocation11]
    $region49: #{tpu_custom_call.1} parent=1 // pred_fallthru
      _
    // Predicated region
    $region50: #{tpu_custom_call.1} parent=1 // pred_check
      _
    $region51: #{tpu_custom_call.1} parent=1 // pred_check_branch
      %997 = sbr.rel (0) target = $region53
    $region52: #{tpu_custom_call.1} parent=1 // pred_region
      %998 = dma.done [#allocation5], 32
    $region53: #{tpu_custom_call.1} parent=1 // pred_fallthru
      _
    // Predicated region
    $region54: #{tpu_custom_call.1} parent=1 // pred_check
      _
    $region55: #{tpu_custom_call.1} parent=1 // pred_check_branch
      %1000 = sbr.rel (0) target = $region57
    $region56: #{tpu_custom_call.1} parent=1 // pred_region
      %1001 = dma.done [#allocation11], 32
    $region57: #{tpu_custom_call.1} parent=1 // pred_fallthru
      _
    %1002 = vsyncpa [#allocation4], 1
    %1003 = vsyncpa [#allocation7], 1
    %1004 = vsyncpa [#allocation5], 1
    %1005 = vsyncpa [#allocation11], 1

</llo_original>
